<compile_context>
chip_gen: v7x
topology: tpu7x:2x2x1
jax: 0.10.0
libtpu: 0.0.40
codegen_flags: <defaults>
</compile_context>

<pallas_src>
import functools

import jax
import jax.numpy as jnp
from jax.experimental import pallas as pl
from jax.experimental.pallas import tpu as pltpu

EPS = 1e-8            # epsilon of GeometricMeanLoss
FEAT = 8              # synthetic feature-channel count for perceptual / lpips
MAX_TILE_P = 32768    # pixel (lane) tile


def _choose_tiling(hw, max_tile=MAX_TILE_P):
    """Returns (tile_p, padded_hw).

    tile_p is the full pixel row (always a legal block) or a 128-multiple
    divisor of hw; if no friendly divisor exists, hw is zero-padded up to a
    multiple of the tile (exact: zero pixels contribute 0 to every branch)."""
    if hw <= max_tile:
        return hw, hw
    t = (max_tile // 128) * 128
    while t >= 1024:
        if hw % t == 0:
            return t, hw
        t -= 128
    t = (max_tile // 128) * 128
    return t, ((hw + t - 1) // t) * t


def _hybrid_loss_kernel(r_ref, t_ref, w_ref, wch_ref, out_ref,
                        acc_perc, acc_l1, acc_lpips, *, feat):
    j = pl.program_id(2)                     # innermost pixel-tile (reduction) axis

    @pl.when(j == 0)
    def _init():
        acc_perc[...] = jnp.zeros_like(acc_perc)
        acc_l1[...] = jnp.zeros_like(acc_l1)
        acc_lpips[...] = jnp.zeros_like(acc_lpips)

    r = r_ref[...].astype(jnp.float32)       # (C, tile_p)
    t = t_ref[...].astype(jnp.float32)

    # ---- L1: this tile's contribution is reduced immediately (no full-width acc)
    acc_l1[...] += jnp.sum(jnp.abs(r - t), keepdims=True)               # (1, 1)

    # ---- feature extraction: bf16 MXU operands, f32 accumulation.  The raw
    #      (C, tile_p) tiles feed the dot directly; Mosaic pads the K=C dim.
    w = w_ref[...]                                                       # (2F, C) bf16
    fr = jnp.dot(w, r.astype(jnp.bfloat16), preferred_element_type=jnp.float32)
    ft = jnp.dot(w, t.astype(jnp.bfloat16), preferred_element_type=jnp.float32)

    # ---- "perceptual": ReLU features, L1 feature distance, fully reduced
    pd = jnp.abs(jnp.maximum(fr[:feat, :], 0.0) - jnp.maximum(ft[:feat, :], 0.0))
    acc_perc[...] += jnp.sum(pd, keepdims=True)                          # (1, 1)

    # ---- "lpips": unit-normalized features, squared distance; lane-reduced per
    #      tile, per-channel weights applied once at finalize (linear in w).
    gr = fr[feat:, :]
    gt = ft[feat:, :]
    gr = gr * jax.lax.rsqrt(jnp.sum(gr * gr, axis=0, keepdims=True) + 1e-10)
    gt = gt * jax.lax.rsqrt(jnp.sum(gt * gt, axis=0, keepdims=True) + 1e-10)
    acc_lpips[...] += jnp.sum((gr - gt) ** 2, axis=-1, keepdims=True)    # (F, 1)

    @pl.when(j == pl.num_programs(2) - 1)
    def _finalize():
        # single lane-packed store per (batch, pixel-split) pair:
        # lane 0 = perceptual partial, lane 1 = l1 partial, lane 2 = lpips partial
        lp = jnp.sum(acc_lpips[...] * wch_ref[...], keepdims=True)       # (1, 1)
        lane = jax.lax.broadcasted_iota(jnp.int32, (1, 128), 1)
        out_ref[...] = jnp.where(
            lane == 0, acc_perc[...],
            jnp.where(lane == 1, acc_l1[...],
                      jnp.where(lane == 2, lp, 0.0)))


def geometric_losses_pallas(rendered, target, wp, wl, wch, *, max_tile=MAX_TILE_P):
    """Returns (perceptual, l1, lpips) scalar means computed in one Pallas kernel."""
    N, C, H, W = rendered.shape
    HW = H * W
    P = N * HW
    F = wp.shape[0]
    assert wp.shape == (F, C) and wl.shape == (F, C) and wch.shape == (F, 1)

    tile_p, hw_pad = _choose_tiling(HW, max_tile)

    # Free, contiguous reshape: no transpose / no channel padding in HBM.
    r = rendered.reshape(N, C, HW)
    t = target.reshape(N, C, HW)
    if hw_pad != HW:
        # pathological HW only: pad pixels with zeros (exactly zero contribution)
        pad = ((0, 0), (0, 0), (0, hw_pad - HW))
        r = jnp.pad(r, pad)
        t = jnp.pad(t, pad)

    nt = hw_pad // tile_p
    split = 2 if nt % 2 == 0 else 1          # 2-way pixel split -> both v7x TCs
    nt_inner = nt // split

    # tiny 1x1-conv weights, stacked once; bf16 MXU operands
    wcat = jnp.concatenate([wp, wl], axis=0).astype(jnp.bfloat16)        # (2F, C)
    wch32 = wch.astype(jnp.float32)

    def rt_index_map(i, s, j):
        return (i, 0, s * nt_inner + j)

    if nt_inner >= 3:
        # deepen input pipelining only when the reduction axis is long enough
        rt_spec = pl.BlockSpec((pl.Squeezed(), C, tile_p), rt_index_map,
                               pipeline_mode=pl.Buffered(3))
    else:
        rt_spec = pl.BlockSpec((pl.Squeezed(), C, tile_p), rt_index_map)

    kernel = functools.partial(_hybrid_loss_kernel, feat=F)

    out = pl.pallas_call(
        kernel,
        out_shape=jax.ShapeDtypeStruct((N, split, 1, 128), jnp.float32),
        grid_spec=pltpu.PrefetchScalarGridSpec(
            num_scalar_prefetch=0,
            grid=(N, split, nt_inner),
            in_specs=[
                rt_spec,                                         # rendered
                rt_spec,                                         # target
                pl.BlockSpec((2 * F, C), lambda i, s, j: (0, 0)),  # stacked weights
                pl.BlockSpec((F, 1), lambda i, s, j: (0, 0)),      # lpips channel w
            ],
            out_specs=pl.BlockSpec((pl.Squeezed(), pl.Squeezed(), 1, 128),
                                   lambda i, s, j: (i, s, 0, 0)),
            scratch_shapes=[
                pltpu.VMEM((1, 1), jnp.float32),    # acc_perc
                pltpu.VMEM((1, 1), jnp.float32),    # acc_l1
                pltpu.VMEM((F, 1), jnp.float32),    # acc_lpips (per-feature)
            ],
        ),
        compiler_params=pltpu.CompilerParams(
            # batch and pixel-split axes carry independent partial sums ->
            # megacore parallel; innermost pixel-tile axis is the reduction.
            dimension_semantics=("parallel", "parallel", "arbitrary"),
            vmem_limit_bytes=48 * 1024 * 1024,
        ),
    )(r, t, wcat, wch32)

    # tiny cross-core / cross-split reduction + mean scaling in plain JAX
    perc = jnp.sum(out[..., 0]) / (F * P)
    l1 = jnp.sum(out[..., 1]) / (C * P)
    lpips = jnp.sum(out[..., 2]) / P
    return perc, l1, lpips


def hybrid_geometric_uncertainty_loss(rendered, target, params):
    """Reproduces HybridGeometricUncertaintyLoss.forward."""
    perc, l1, lpips = geometric_losses_pallas(
        rendered, target, params["wp"], params["wl"], params["wch"]
    )

    log_p = jnp.log(perc + EPS)
    log_l1 = jnp.log(l1 + EPS)
    log_lp = jnp.log(lpips + EPS)

    losses = {
        "perceptual": perc,
        "l1": l1,
        "lpips": lpips,
        "log_perceptual": log_p,
        "log_l1": log_l1,
        "log_lpips": log_lp,
        "geometric_mean": jnp.exp((log_p + log_l1 + log_lp) / 3.0),
    }

    # --- uncertainty weighting (exactly as in the PyTorch module) ---
    scales = {k: jnp.exp(v) for k, v in params["log_scales"].items()}
    log_sum = (losses["log_perceptual"] / scales["perceptual"]
               + losses["log_l1"] / scales["l1"]
               + losses["log_lpips"] / scales["lpips"])
    scale_reg = sum(jnp.log(s) for s in scales.values())
    losses["total"] = log_sum + losses.get("regularization", 0) + 0.1 * scale_reg
    losses["scale_reg"] = scale_reg
    for k, v in scales.items():
        losses[f"{k}_scale"] = v
    return losses


def init_params(key, channels=3, feat=FEAT):
    kp, kl, kc = jax.random.split(key, 3)
    wp = jax.random.normal(kp, (feat, channels), dtype=jnp.float32) * 0.5
    wl = jax.random.normal(kl, (feat, channels), dtype=jnp.float32) * 0.5
    wch = jnp.abs(jax.random.normal(kc, (feat, 1), dtype=jnp.float32)) * 0.5 + 0.1
    log_scales = {  # nn.Parameter(torch.zeros(1)) for each task
        "perceptual": jnp.zeros((1,), jnp.float32),
        "l1": jnp.zeros((1,), jnp.float32),
        "lpips": jnp.zeros((1,), jnp.float32),
    }
    return {"wp": wp, "wl": wl, "wch": wch, "log_scales": log_scales}


if __name__ == "__main__":
    key = jax.random.PRNGKey(0)
    k_r, k_t, k_w = jax.random.split(key, 3)

    N, C, H, W = 2, 3, 16, 16  # NCHW, as in PyTorch
    rendered = jax.random.uniform(k_r, (N, C, H, W), dtype=jnp.float32)
    target = jax.random.uniform(k_t, (N, C, H, W), dtype=jnp.float32)

    params = init_params(k_w, channels=C)

    losses = jax.jit(hybrid_geometric_uncertainty_loss)(rendered, target, params)
    jax.block_until_ready(losses["total"])
    print("KERNEL_OK")
</pallas_src>

<mosaic_0001>
module attributes {stable_mosaic.version = 11 : i64} {
  func.func @_hybrid_loss_kernel(%arg0: i32, %arg1: i32, %arg2: i32, %arg3: memref<1x3x256xf32, #tpu.memory_space<vmem>>, %arg4: memref<1x3x256xf32, #tpu.memory_space<vmem>>, %arg5: memref<16x3xbf16, #tpu.memory_space<vmem>>, %arg6: memref<8x1xf32, #tpu.memory_space<vmem>>, %arg7: memref<1x1x1x128xf32, #tpu.memory_space<vmem>>, %arg8: memref<1x1xf32, #tpu.memory_space<vmem>>, %arg9: memref<1x1xf32, #tpu.memory_space<vmem>>, %arg10: memref<8x1xf32, #tpu.memory_space<vmem>>) attributes {dimension_semantics = [#tpu.dimension_semantics<parallel>, #tpu.dimension_semantics<parallel>, #tpu.dimension_semantics<arbitrary>], iteration_bounds = array<i64: 2, 1, 1>, scalar_prefetch = 0 : i64, scratch_operands = 3 : i64, tpu.core_type = #tpu.core_type<tc>, window_params = [{transform_indices = @transform_0, window_bounds = array<i64: 1, 3, 256>}, {transform_indices = @transform_1, window_bounds = array<i64: 1, 3, 256>}, {pipeline_mode = #tpu.pipeline_mode<synchronous>, transform_indices = @transform_2, window_bounds = array<i64: 16, 3>}, {pipeline_mode = #tpu.pipeline_mode<synchronous>, transform_indices = @transform_3, window_bounds = array<i64: 8, 1>}, {transform_indices = @transform_4, window_bounds = array<i64: 1, 1, 1, 128>}]} {
    %c0_i32 = arith.constant 0 : i32
    %0 = arith.cmpi eq, %arg2, %c0_i32 : i32
    %1 = arith.extui %0 : i1 to i32
    %c0_i32_0 = arith.constant 0 : i32
    %2 = arith.cmpi ne, %1, %c0_i32_0 : i32
    scf.if %2 {
      %cst_32 = arith.constant 0.000000e+00 : f32
      %66 = vector.broadcast %cst_32 : f32 to vector<1x1xf32>
      %c0_33 = arith.constant 0 : index
      %c0_34 = arith.constant 0 : index
      %67 = vector.load %arg8[%c0_33, %c0_34] : memref<1x1xf32, #tpu.memory_space<vmem>>, vector<1x1xf32>
      tpu.vector_store %arg8[%c0_33, %c0_34], %66 {strides = array<i32>} : memref<1x1xf32, #tpu.memory_space<vmem>>, vector<1x1xf32>,
      %cst_35 = arith.constant 0.000000e+00 : f32
      %68 = vector.broadcast %cst_35 : f32 to vector<1x1xf32>
      %c0_36 = arith.constant 0 : index
      %c0_37 = arith.constant 0 : index
      %69 = vector.load %arg9[%c0_36, %c0_37] : memref<1x1xf32, #tpu.memory_space<vmem>>, vector<1x1xf32>
      tpu.vector_store %arg9[%c0_36, %c0_37], %68 {strides = array<i32>} : memref<1x1xf32, #tpu.memory_space<vmem>>, vector<1x1xf32>,
      %cst_38 = arith.constant 0.000000e+00 : f32
      %70 = vector.broadcast %cst_38 : f32 to vector<8x1xf32>
      %c0_39 = arith.constant 0 : index
      %c0_40 = arith.constant 0 : index
      %71 = vector.load %arg10[%c0_39, %c0_40] : memref<8x1xf32, #tpu.memory_space<vmem>>, vector<8x1xf32>
      tpu.vector_store %arg10[%c0_39, %c0_40], %70 {strides = array<i32>} : memref<8x1xf32, #tpu.memory_space<vmem>>, vector<8x1xf32>,
    } else {
    }
    %c0 = arith.constant 0 : index
    %c0_1 = arith.constant 0 : index
    %c0_2 = arith.constant 0 : index
    %3 = vector.load %arg3[%c0, %c0_1, %c0_2] : memref<1x3x256xf32, #tpu.memory_space<vmem>>, vector<1x3x256xf32>
    %4 = vector.shape_cast %3 : vector<1x3x256xf32> to vector<3x256xf32>
    %c0_3 = arith.constant 0 : index
    %c0_4 = arith.constant 0 : index
    %c0_5 = arith.constant 0 : index
    %5 = vector.load %arg4[%c0_3, %c0_4, %c0_5] : memref<1x3x256xf32, #tpu.memory_space<vmem>>, vector<1x3x256xf32>
    %6 = vector.shape_cast %5 : vector<1x3x256xf32> to vector<3x256xf32>
    %c0_6 = arith.constant 0 : index
    %c0_7 = arith.constant 0 : index
    %7 = vector.load %arg9[%c0_6, %c0_7] : memref<1x1xf32, #tpu.memory_space<vmem>>, vector<1x1xf32>
    %8 = arith.subf %4, %6 : vector<3x256xf32>
    %9 = math.absf %8 : vector<3x256xf32>
    %10 = vector.shape_cast %9 : vector<3x256xf32> to vector<1x3x256xf32>
    %cst = arith.constant dense<0.000000e+00> : vector<1xf32>
    %11 = vector.multi_reduction <add>, %10, %cst [1, 2] : vector<1x3x256xf32> to vector<1xf32>
    %12 = vector.shape_cast %11 : vector<1xf32> to vector<1x1x1xf32>
    %13 = vector.extract %12[0, 0, 0] : f32 from vector<1x1x1xf32>
    %14 = vector.broadcast %13 : f32 to vector<1x1xf32>
    %15 = arith.addf %7, %14 : vector<1x1xf32>
    %c0_8 = arith.constant 0 : index
    %c0_9 = arith.constant 0 : index
    %16 = vector.load %arg9[%c0_8, %c0_9] : memref<1x1xf32, #tpu.memory_space<vmem>>, vector<1x1xf32>
    tpu.vector_store %arg9[%c0_8, %c0_9], %15 {strides = array<i32>} : memref<1x1xf32, #tpu.memory_space<vmem>>, vector<1x1xf32>,
    %c0_10 = arith.constant 0 : index
    %c0_11 = arith.constant 0 : index
    %17 = vector.load %arg5[%c0_10, %c0_11] : memref<16x3xbf16, #tpu.memory_space<vmem>>, vector<16x3xbf16>
    %18 = arith.truncf %4 : vector<3x256xf32> to vector<3x256xbf16>
    %cst_12 = arith.constant dense<0.000000e+00> : vector<16x256xf32>
    %19 = tpu.matmul %17, %18, %cst_12 {dimension_numbers = #tpu.dot_dimension_numbers<[1], [0], [0], [1], [0, 0, 1, 1], [], []>} : vector<16x3xbf16>, vector<3x256xbf16>, vector<16x256xf32> -> vector<16x256xf32>
    %20 = arith.truncf %6 : vector<3x256xf32> to vector<3x256xbf16>
    %cst_13 = arith.constant dense<0.000000e+00> : vector<16x256xf32>
    %21 = tpu.matmul %17, %20, %cst_13 {dimension_numbers = #tpu.dot_dimension_numbers<[1], [0], [0], [1], [0, 0, 1, 1], [], []>} : vector<16x3xbf16>, vector<3x256xbf16>, vector<16x256xf32> -> vector<16x256xf32>
    %22 = vector.extract_strided_slice %19 {offsets = [0, 0], sizes = [8, 256], strides = [1, 1]} : vector<16x256xf32> to vector<8x256xf32>
    %cst_14 = arith.constant 0.000000e+00 : f32
    %23 = vector.broadcast %cst_14 : f32 to vector<8x256xf32>
    %24 = arith.maximumf %22, %23 : vector<8x256xf32>
    %25 = vector.extract_strided_slice %21 {offsets = [0, 0], sizes = [8, 256], strides = [1, 1]} : vector<16x256xf32> to vector<8x256xf32>
    %cst_15 = arith.constant 0.000000e+00 : f32
    %26 = vector.broadcast %cst_15 : f32 to vector<8x256xf32>
    %27 = arith.maximumf %25, %26 : vector<8x256xf32>
    %28 = arith.subf %24, %27 : vector<8x256xf32>
    %29 = math.absf %28 : vector<8x256xf32>
    %c0_16 = arith.constant 0 : index
    %c0_17 = arith.constant 0 : index
    %30 = vector.load %arg8[%c0_16, %c0_17] : memref<1x1xf32, #tpu.memory_space<vmem>>, vector<1x1xf32>
    %31 = vector.shape_cast %29 : vector<8x256xf32> to vector<1x8x256xf32>
    %cst_18 = arith.constant dense<0.000000e+00> : vector<1xf32>
    %32 = vector.multi_reduction <add>, %31, %cst_18 [1, 2] : vector<1x8x256xf32> to vector<1xf32>
    %33 = vector.shape_cast %32 : vector<1xf32> to vector<1x1x1xf32>
    %34 = vector.extract %33[0, 0, 0] : f32 from vector<1x1x1xf32>
    %35 = vector.broadcast %34 : f32 to vector<1x1xf32>
    %36 = arith.addf %30, %35 : vector<1x1xf32>
    %c0_19 = arith.constant 0 : index
    %c0_20 = arith.constant 0 : index
    %37 = vector.load %arg8[%c0_19, %c0_20] : memref<1x1xf32, #tpu.memory_space<vmem>>, vector<1x1xf32>
    tpu.vector_store %arg8[%c0_19, %c0_20], %36 {strides = array<i32>} : memref<1x1xf32, #tpu.memory_space<vmem>>, vector<1x1xf32>,
    %38 = vector.extract_strided_slice %19 {offsets = [8, 0], sizes = [8, 256], strides = [1, 1]} : vector<16x256xf32> to vector<8x256xf32>
    %39 = vector.extract_strided_slice %21 {offsets = [8, 0], sizes = [8, 256], strides = [1, 1]} : vector<16x256xf32> to vector<8x256xf32>
    %40 = arith.mulf %38, %38 : vector<8x256xf32>
    %cst_21 = arith.constant dense<0.000000e+00> : vector<256xf32>
    %41 = vector.multi_reduction <add>, %40, %cst_21 [0] : vector<8x256xf32> to vector<256xf32>
    %42 = vector.shape_cast %41 : vector<256xf32> to vector<1x256xf32>
    %cst_22 = arith.constant 1.000000e-10 : f32
    %43 = vector.broadcast %cst_22 : f32 to vector<1x256xf32>
    %44 = arith.addf %42, %43 : vector<1x256xf32>
    %45 = math.rsqrt %44 : vector<1x256xf32>
    %46 = vector.broadcast %45 : vector<1x256xf32> to vector<8x256xf32>
    %47 = arith.mulf %38, %46 : vector<8x256xf32>
    %48 = arith.mulf %39, %39 : vector<8x256xf32>
    %cst_23 = arith.constant dense<0.000000e+00> : vector<256xf32>
    %49 = vector.multi_reduction <add>, %48, %cst_23 [0] : vector<8x256xf32> to vector<256xf32>
    %50 = vector.shape_cast %49 : vector<256xf32> to vector<1x256xf32>
    %cst_24 = arith.constant 1.000000e-10 : f32
    %51 = vector.broadcast %cst_24 : f32 to vector<1x256xf32>
    %52 = arith.addf %50, %51 : vector<1x256xf32>
    %53 = math.rsqrt %52 : vector<1x256xf32>
    %54 = vector.broadcast %53 : vector<1x256xf32> to vector<8x256xf32>
    %55 = arith.mulf %39, %54 : vector<8x256xf32>
    %c0_25 = arith.constant 0 : index
    %c0_26 = arith.constant 0 : index
    %56 = vector.load %arg10[%c0_25, %c0_26] : memref<8x1xf32, #tpu.memory_space<vmem>>, vector<8x1xf32>
    %57 = arith.subf %47, %55 : vector<8x256xf32>
    %58 = arith.mulf %57, %57 : vector<8x256xf32>
    %cst_27 = arith.constant dense<0.000000e+00> : vector<8xf32>
    %59 = vector.multi_reduction <add>, %58, %cst_27 [1] : vector<8x256xf32> to vector<8xf32>
    %60 = vector.shape_cast %59 : vector<8xf32> to vector<8x1xf32>
    %61 = arith.addf %56, %60 : vector<8x1xf32>
    %c0_28 = arith.constant 0 : index
    %c0_29 = arith.constant 0 : index
    %62 = vector.load %arg10[%c0_28, %c0_29] : memref<8x1xf32, #tpu.memory_space<vmem>>, vector<8x1xf32>
    tpu.vector_store %arg10[%c0_28, %c0_29], %61 {strides = array<i32>} : memref<8x1xf32, #tpu.memory_space<vmem>>, vector<8x1xf32>,
    %c0_i32_30 = arith.constant 0 : i32
    %63 = arith.cmpi eq, %arg2, %c0_i32_30 : i32
    %64 = arith.extui %63 : i1 to i32
    %c0_i32_31 = arith.constant 0 : i32
    %65 = arith.cmpi ne, %64, %c0_i32_31 : i32
    scf.if %65 {
      %c0_32 = arith.constant 0 : index
      %c0_33 = arith.constant 0 : index
      %66 = vector.load %arg10[%c0_32, %c0_33] : memref<8x1xf32, #tpu.memory_space<vmem>>, vector<8x1xf32>
      %c0_34 = arith.constant 0 : index
      %c0_35 = arith.constant 0 : index
      %67 = vector.load %arg6[%c0_34, %c0_35] : memref<8x1xf32, #tpu.memory_space<vmem>>, vector<8x1xf32>
      %68 = arith.mulf %66, %67 : vector<8x1xf32>
      %69 = vector.shape_cast %68 : vector<8x1xf32> to vector<1x8x1xf32>
      %cst_36 = arith.constant dense<0.000000e+00> : vector<1xf32>
      %70 = vector.multi_reduction <add>, %69, %cst_36 [1, 2] : vector<1x8x1xf32> to vector<1xf32>
      %71 = vector.shape_cast %70 : vector<1xf32> to vector<1x1x1xf32>
      %72 = vector.extract %71[0, 0, 0] : f32 from vector<1x1x1xf32>
      %73 = vector.broadcast %72 : f32 to vector<1x1xf32>
      %74 = tpu.iota {dimensions = array<i32: 1>} : vector<1x128xi32>
      %c0_i32_37 = arith.constant 0 : i32
      %75 = vector.broadcast %c0_i32_37 : i32 to vector<1x128xi32>
      %76 = arith.cmpi eq, %74, %75 : vector<1x128xi32>
      %c0_38 = arith.constant 0 : index
      %c0_39 = arith.constant 0 : index
      %77 = vector.load %arg8[%c0_38, %c0_39] : memref<1x1xf32, #tpu.memory_space<vmem>>, vector<1x1xf32>
      %c1_i32 = arith.constant 1 : i32
      %78 = vector.broadcast %c1_i32 : i32 to vector<1x128xi32>
      %79 = arith.cmpi eq, %74, %78 : vector<1x128xi32>
      %c0_40 = arith.constant 0 : index
      %c0_41 = arith.constant 0 : index
      %80 = vector.load %arg9[%c0_40, %c0_41] : memref<1x1xf32, #tpu.memory_space<vmem>>, vector<1x1xf32>
      %c2_i32 = arith.constant 2 : i32
      %81 = vector.broadcast %c2_i32 : i32 to vector<1x128xi32>
      %82 = arith.cmpi eq, %74, %81 : vector<1x128xi32>
      %cst_42 = arith.constant 0.000000e+00 : f32
      %83 = vector.shape_cast %73 : vector<1x1xf32> to vector<1x1xf32>
      %84 = vector.broadcast %83 : vector<1x1xf32> to vector<1x128xf32>
      %85 = vector.broadcast %cst_42 : f32 to vector<1x128xf32>
      %86 = arith.select %82, %84, %85 : vector<1x128xi1>, vector<1x128xf32>
      %87 = vector.shape_cast %80 : vector<1x1xf32> to vector<1x1xf32>
      %88 = vector.broadcast %87 : vector<1x1xf32> to vector<1x128xf32>
      %89 = arith.select %79, %88, %86 : vector<1x128xi1>, vector<1x128xf32>
      %90 = vector.shape_cast %77 : vector<1x1xf32> to vector<1x1xf32>
      %91 = vector.broadcast %90 : vector<1x1xf32> to vector<1x128xf32>
      %92 = arith.select %76, %91, %89 : vector<1x128xi1>, vector<1x128xf32>
      %c0_43 = arith.constant 0 : index
      %c0_44 = arith.constant 0 : index
      %c0_45 = arith.constant 0 : index
      %c0_46 = arith.constant 0 : index
      %93 = vector.load %arg7[%c0_43, %c0_44, %c0_45, %c0_46] : memref<1x1x1x128xf32, #tpu.memory_space<vmem>>, vector<1x1x1x128xf32>
      %94 = vector.shape_cast %93 : vector<1x1x1x128xf32> to vector<1x128xf32>
      %95 = vector.shape_cast %92 : vector<1x128xf32> to vector<1x1x1x128xf32>
      tpu.vector_store %arg7[%c0_43, %c0_44, %c0_45, %c0_46], %95 {strides = array<i32>} : memref<1x1x1x128xf32, #tpu.memory_space<vmem>>, vector<1x1x1x128xf32>,
    } else {
    }
    return
  }
  func.func @transform_0(%arg0: i32, %arg1: i32, %arg2: i32) -> (i32, i32, i32) {
    %c1_i32 = arith.constant 1 : i32
    %0 = arith.muli %arg1, %c1_i32 : i32
    %1 = arith.addi %0, %arg2 : i32
    %c0_i32 = arith.constant 0 : i32
    %c0_i32_0 = arith.constant 0 : i32
    return %arg0, %c0_i32, %1 : i32, i32, i32
  }
  func.func @transform_1(%arg0: i32, %arg1: i32, %arg2: i32) -> (i32, i32, i32) {
    %c1_i32 = arith.constant 1 : i32
    %0 = arith.muli %arg1, %c1_i32 : i32
    %1 = arith.addi %0, %arg2 : i32
    %c0_i32 = arith.constant 0 : i32
    %c0_i32_0 = arith.constant 0 : i32
    return %arg0, %c0_i32, %1 : i32, i32, i32
  }
  func.func @transform_2(%arg0: i32, %arg1: i32, %arg2: i32) -> (i32, i32) {
    %c0_i32 = arith.constant 0 : i32
    %c0_i32_0 = arith.constant 0 : i32
    %c0_i32_1 = arith.constant 0 : i32
    return %c0_i32, %c0_i32_0 : i32, i32
  }
  func.func @transform_3(%arg0: i32, %arg1: i32, %arg2: i32) -> (i32, i32) {
    %c0_i32 = arith.constant 0 : i32
    %c0_i32_0 = arith.constant 0 : i32
    %c0_i32_1 = arith.constant 0 : i32
    return %c0_i32, %c0_i32_0 : i32, i32
  }
  func.func @transform_4(%arg0: i32, %arg1: i32, %arg2: i32) -> (i32, i32, i32, i32) {
    %c0_i32 = arith.constant 0 : i32
    %c0_i32_0 = arith.constant 0 : i32
    %c0_i32_1 = arith.constant 0 : i32
    return %arg0, %arg1, %c0_i32, %c0_i32_0 : i32, i32, i32, i32
  }
}

</mosaic_0001>

<llo_original>
// kernel: hybrid_geometric_uncertainty_loss.1
$region0: #{hybrid_geometric_uncertainty_loss.1}
  #allocation0 [shape = 'u32[]', space=smem, size = 0x4, offset = 0x4, fixed_abs, tag = 'smem constant byte address 0x4 - core index']
  #allocation1 [shape = 'u32[144,128]{1,0:T(1,128)}', space=vmem, size = 0x12000, scoped, tag = 'internal scratch']
  #allocation2 [shape = 'f32[1,1]{1,0:T(1,128)}', space=vmem, size = 0x200, scoped, tag = 'scratch operand']
  #allocation3 [shape = 'f32[1,1]{1,0:T(1,128)}', space=vmem, size = 0x200, scoped, tag = 'scratch operand']
  #allocation4 [shape = 'f32[8,1]{1,0:T(8,128)}', space=vmem, size = 0x1000, scoped, tag = 'scratch operand']
  %s0 = inlined_call_operand.vmem [shape: f32[2,3,256], index: 0, kind: input, shape index: {}]
  %s1 = inlined_call_operand.vmem [shape: f32[2,3,256], index: 1, kind: input, shape index: {}]
  %s2 = inlined_call_operand.vmem [shape: bf16[16,3], index: 2, kind: input, shape index: {}]
  %s3 = inlined_call_operand.vmem [shape: f32[8,1], index: 3, kind: input, shape index: {}]
  %s4 = inlined_call_operand.vmem [shape: f32[2,1,1,128], index: 4, kind: output, shape index: {}]
  %s5 = sld [smem:[#allocation0]]
  $region57: #{hybrid_geometric_uncertainty_loss.1} parent=0
    _
  %s7 = ssub.s32 1, %s5
  %s8 = scalar_select 0, %s7, %s5
  loop: start=0, step=1, limit=4
  $region2: #{hybrid_geometric_uncertainty_loss.1} parent=0 // loop_pre_header
    _
  $region3: #{hybrid_geometric_uncertainty_loss.1} parent=0 // loop_header
    %s10 = sphi 0, %s14
    %p11 = scmp.ge.s32.totalorder %s10, 4
    %s17 = sphi 0, %s36
    %s18 = sphi 0, %s32
    %s19 = sphi 0, %s28
    %s20 = sphi 0, %s17
    %s21 = sphi 0, %s18
    %s22 = sphi 0, %s19
    %s23 = sphi 0, %s20
    %s24 = sphi 0, %s21
    %s25 = sphi 0, %s22
    %s43 = sphi 0, %s45
    %s46 = sphi 0, %s43
    %s47 = sphi 0, %s46
    %s63 = sphi 0, %s47
    %s73 = sphi 0, %s75
    %s76 = sphi 0, %s73
    %s77 = sphi 0, %s76
    %s93 = sphi 0, %s77
    %s97 = sphi 0, %s97
    %s99 = sphi 0, %s97
    %s100 = sphi 0, %s99
    %s114 = sphi 0, %s100
    %s118 = sphi 0, %s118
    %s120 = sphi 0, %s118
    %s121 = sphi 0, %s120
    %s135 = sphi 0, %s121
    %s143 = sphi 0, %s145
    %s146 = sphi 0, %s143
    %s147 = sphi 0, %s146
    %s163 = sphi 0, %s147
  $region4: #{hybrid_geometric_uncertainty_loss.1} parent=0 // loop_header_branch
    %13 = sbr.rel (%p11) target = $region8
  $region5: #{hybrid_geometric_uncertainty_loss.1} parent=0 // loop_body
    %s15 = ssub.s32 %s10, 1
    %s16 = ssub.s32 %s10, 2
    %s26 = sadd.s32 1, %s19
    %p27 = scmp.ge.s32.totalorder %s26, 1
    %s28 = scalar_select %p27, 0, %s26
    %s29 = sadd.s32 1, %s18
    %s30 = scalar_select %p27, %s29, %s18
    %p31 = scmp.ge.s32.totalorder %s30, 1
    %s32 = scalar_select %p31, 0, %s30
    %s33 = sadd.s32 1, %s17
    %s34 = scalar_select %p31, %s33, %s17
    %p35 = scmp.ge.s32.totalorder %s34, 2
    %s36 = scalar_select %p35, 0, %s34
    %s37 = sadd.s32 %s18, %s19
    %s38 = sadd.s32 %s32, %s28
    %s39 = ssub.s32 %s17, %s36
    %s40 = ssub.s32 %s37, %s38
    %s41 = sor.u32 %s39, %s40
    %p42 = scmp.eq.s32.totalorder %s41, 0
    %s44 = sadd.s32 %s43, 1
    %s45 = scalar_select %p42, %s43, %s44
    %p48 = pneg %p42
    %p49 = scmp.eq.s32.totalorder %s10, 1
    %p50 = por %p48, %p49
    %p51 = scmp.ne.s32.totalorder %s43, %s46
    %p52 = scmp.eq.s32.totalorder %s10, 0
    %p53 = por %p51, %p52
    %p54 = scmp.ne.s32.totalorder %s43, %s46
    %p55 = scmp.eq.s32.totalorder %s15, 1
    %p56 = por %p54, %p55
    %p57 = scmp.ne.s32.totalorder %s46, %s47
    %p58 = scmp.eq.s32.totalorder %s15, 0
    %p59 = por %p57, %p58
    %p60 = scmp.ne.s32.totalorder %s46, %s47
    %p61 = scmp.eq.s32.totalorder %s16, 1
    %p62 = por %p60, %p61
    %p64 = scmp.ne.s32.totalorder %s47, %s63
    %p65 = scmp.eq.s32.totalorder %s16, 0
    %p66 = por %p64, %p65
    %s67 = sadd.s32 %s18, %s19
    %s68 = sadd.s32 %s32, %s28
    %s69 = ssub.s32 %s17, %s36
    %s70 = ssub.s32 %s67, %s68
    %s71 = sor.u32 %s69, %s70
    %p72 = scmp.eq.s32.totalorder %s71, 0
    %s74 = sadd.s32 %s73, 1
    %s75 = scalar_select %p72, %s73, %s74
    %p78 = pneg %p72
    %p79 = scmp.eq.s32.totalorder %s10, 1
    %p80 = por %p78, %p79
    %p81 = scmp.ne.s32.totalorder %s73, %s76
    %p82 = scmp.eq.s32.totalorder %s10, 0
    %p83 = por %p81, %p82
    %p84 = scmp.ne.s32.totalorder %s73, %s76
    %p85 = scmp.eq.s32.totalorder %s15, 1
    %p86 = por %p84, %p85
    %p87 = scmp.ne.s32.totalorder %s76, %s77
    %p88 = scmp.eq.s32.totalorder %s15, 0
    %p89 = por %p87, %p88
    %p90 = scmp.ne.s32.totalorder %s76, %s77
    %p91 = scmp.eq.s32.totalorder %s16, 1
    %p92 = por %p90, %p91
    %p94 = scmp.ne.s32.totalorder %s77, %s93
    %p95 = scmp.eq.s32.totalorder %s16, 0
    %p96 = por %p94, %p95
    %s98 = sadd.s32 %s97, 1
    %p101 = scmp.eq.s32.totalorder %s10, 1
    %p102 = scmp.ne.s32.totalorder %s97, %s99
    %p103 = scmp.eq.s32.totalorder %s10, 0
    %p104 = por %p102, %p103
    %p105 = scmp.ne.s32.totalorder %s97, %s99
    %p106 = scmp.eq.s32.totalorder %s15, 1
    %p107 = por %p105, %p106
    %p108 = scmp.ne.s32.totalorder %s99, %s100
    %p109 = scmp.eq.s32.totalorder %s15, 0
    %p110 = por %p108, %p109
    %p111 = scmp.ne.s32.totalorder %s99, %s100
    %p112 = scmp.eq.s32.totalorder %s16, 1
    %p113 = por %p111, %p112
    %p115 = scmp.ne.s32.totalorder %s100, %s114
    %p116 = scmp.eq.s32.totalorder %s16, 0
    %p117 = por %p115, %p116
    %s119 = sadd.s32 %s118, 1
    %p122 = scmp.eq.s32.totalorder %s10, 1
    %p123 = scmp.ne.s32.totalorder %s118, %s120
    %p124 = scmp.eq.s32.totalorder %s10, 0
    %p125 = por %p123, %p124
    %p126 = scmp.ne.s32.totalorder %s118, %s120
    %p127 = scmp.eq.s32.totalorder %s15, 1
    %p128 = por %p126, %p127
    %p129 = scmp.ne.s32.totalorder %s120, %s121
    %p130 = scmp.eq.s32.totalorder %s15, 0
    %p131 = por %p129, %p130
    %p132 = scmp.ne.s32.totalorder %s120, %s121
    %p133 = scmp.eq.s32.totalorder %s16, 1
    %p134 = por %p132, %p133
    %p136 = scmp.ne.s32.totalorder %s121, %s135
    %p137 = scmp.eq.s32.totalorder %s16, 0
    %p138 = por %p136, %p137
    %s139 = ssub.s32 %s17, %s36
    %s140 = ssub.s32 %s18, %s32
    %s141 = sor.u32 %s139, %s140
    %p142 = scmp.eq.s32.totalorder %s141, 0
    %s144 = sadd.s32 %s143, 1
    %s145 = scalar_select %p142, %s143, %s144
    %p148 = pneg %p142
    %p149 = scmp.eq.s32.totalorder %s10, 1
    %p150 = por %p148, %p149
    %p151 = scmp.ne.s32.totalorder %s143, %s146
    %p152 = scmp.eq.s32.totalorder %s10, 0
    %p153 = por %p151, %p152
    %p154 = scmp.ne.s32.totalorder %s143, %s146
    %p155 = scmp.eq.s32.totalorder %s15, 1
    %p156 = por %p154, %p155
    %p157 = scmp.ne.s32.totalorder %s146, %s147
    %p158 = scmp.eq.s32.totalorder %s15, 0
    %p159 = por %p157, %p158
    %p160 = scmp.ne.s32.totalorder %s146, %s147
    %p161 = scmp.eq.s32.totalorder %s16, 1
    %p162 = por %p160, %p161
    %p164 = scmp.ne.s32.totalorder %s147, %s163
    %p165 = scmp.eq.s32.totalorder %s16, 0
    %p166 = por %p164, %p165
    %p167 = scmp.le.s32.totalorder 1, %s10
    %p168 = scmp.lt.s32.totalorder %s10, 3
    %p169 = pnand %p167, %p168
    %p170 = pneg %p169
    // Predicated region
    $region9: #{hybrid_geometric_uncertainty_loss.1} parent=5 // pred_check
      _
    $region10: #{hybrid_geometric_uncertainty_loss.1} parent=5 // pred_check_branch
      %172 = sbr.rel (%p169) target = $region12
    $region11: #{hybrid_geometric_uncertainty_loss.1} parent=5 // pred_region
      %s173 = ssub.s32 %s10, 1
      // Predicated region
      $region13: #{hybrid_geometric_uncertainty_loss.1} parent=11 // pred_check
        %p174 = pneg %p110
      $region14: #{hybrid_geometric_uncertainty_loss.1} parent=11 // pred_check_branch
        %176 = sbr.rel (%p174) target = $region16
      $region15: #{hybrid_geometric_uncertainty_loss.1} parent=11 // pred_region
        _
      $region16: #{hybrid_geometric_uncertainty_loss.1} parent=11 // pred_fallthru
        _
      // Predicated region
      $region17: #{hybrid_geometric_uncertainty_loss.1} parent=11 // pred_check
        %p177 = pneg %p131
      $region18: #{hybrid_geometric_uncertainty_loss.1} parent=11 // pred_check_branch
        %179 = sbr.rel (%p177) target = $region20
      $region19: #{hybrid_geometric_uncertainty_loss.1} parent=11 // pred_region
        _
      $region20: #{hybrid_geometric_uncertainty_loss.1} parent=11 // pred_fallthru
        _
    $region12: #{hybrid_geometric_uncertainty_loss.1} parent=5 // pred_fallthru
      _
    %p180 = scmp.lt.s32.totalorder %s10, 2
    // Predicated region
    $region21: #{hybrid_geometric_uncertainty_loss.1} parent=5 // pred_check
      %p181 = pneg %p180
    $region22: #{hybrid_geometric_uncertainty_loss.1} parent=5 // pred_check_branch
      %183 = sbr.rel (%p181) target = $region24
    $region23: #{hybrid_geometric_uncertainty_loss.1} parent=5 // pred_region
      // Predicated region
      $region25: #{hybrid_geometric_uncertainty_loss.1} parent=23 // pred_check
        %p184 = pneg %p53
      $region26: #{hybrid_geometric_uncertainty_loss.1} parent=23 // pred_check_branch
        %186 = sbr.rel (%p184) target = $region28
      $region27: #{hybrid_geometric_uncertainty_loss.1} parent=23 // pred_region
        %s187 = sadd.s32 %s18, %s19
        %s188 = smul.u32 2, %s187
        %p189 = scmp.lt.s32.totalorder %s17, 1
        %s190 = scalar_select %p189, %s17, 1
        %p191 = scmp.lt.s32.totalorder %s188, 1
        %s192 = scalar_select %p191, %s188, 1
        %s193 = smul.addr %s190, 2
        %s194 = sadd.s32 %s192, %s193
        %s195 = smul.addr %s194, 4
        %s196 = scalar_lea.vmem %s0, %s195
        %s197 = sadd.s32 %s18, %s19
        %s198 = smul.u32 2, %s197
      $region28: #{hybrid_geometric_uncertainty_loss.1} parent=23 // pred_fallthru
        _
      // Predicated region
      $region29: #{hybrid_geometric_uncertainty_loss.1} parent=23 // pred_check
        %p199 = pneg %p83
      $region30: #{hybrid_geometric_uncertainty_loss.1} parent=23 // pred_check_branch
        %201 = sbr.rel (%p199) target = $region32
      $region31: #{hybrid_geometric_uncertainty_loss.1} parent=23 // pred_region
        %s202 = sadd.s32 %s18, %s19
        %s203 = smul.u32 2, %s202
        %p204 = scmp.lt.s32.totalorder %s17, 1
        %s205 = scalar_select %p204, %s17, 1
        %p206 = scmp.lt.s32.totalorder %s203, 1
        %s207 = scalar_select %p206, %s203, 1
        %s208 = smul.addr %s205, 2
        %s209 = sadd.s32 %s207, %s208
        %s210 = smul.addr %s209, 4
        %s211 = scalar_lea.vmem %s1, %s210
        %s212 = sadd.s32 %s18, %s19
        %s213 = smul.u32 2, %s212
      $region32: #{hybrid_geometric_uncertainty_loss.1} parent=23 // pred_fallthru
        _
    $region24: #{hybrid_geometric_uncertainty_loss.1} parent=5 // pred_fallthru
      _
    %p214 = scmp.le.s32.totalorder 1, %s10
    %p215 = scmp.lt.s32.totalorder %s10, 3
    %p216 = pnand %p214, %p215
    %p217 = pneg %p216
    // Predicated region
    $region33: #{hybrid_geometric_uncertainty_loss.1} parent=5 // pred_check
      _
    $region34: #{hybrid_geometric_uncertainty_loss.1} parent=5 // pred_check_branch
      %219 = sbr.rel (%p216) target = $region36
    $region35: #{hybrid_geometric_uncertainty_loss.1} parent=5 // pred_region
      %s220 = ssub.s32 %s10, 1
      %s221 = sadd.s32 %s21, %s22
      %s222 = smul.u32 2, %s221
      %p223 = scmp.lt.s32.totalorder %s20, 1
      %s224 = scalar_select %p223, %s20, 1
      %p225 = scmp.lt.s32.totalorder %s222, 1
      %s226 = scalar_select %p225, %s222, 1
      %s227 = smul.addr %s224, 2
      %s228 = sadd.s32 %s226, %s227
      %s229 = smul.addr %s228, 4
      %s230 = scalar_lea.vmem %s0, %s229
      %p231 = pneg %p59
      %p232 = pneg %p56
      %s233 = sadd.s32 %s21, %s22
      %s234 = smul.u32 2, %s233
      %p235 = scmp.lt.s32.totalorder %s20, 1
      %s236 = scalar_select %p235, %s20, 1
      %p237 = scmp.lt.s32.totalorder %s234, 1
      %s238 = scalar_select %p237, %s234, 1
      %s239 = smul.addr %s236, 2
      %s240 = sadd.s32 %s238, %s239
      %s241 = smul.addr %s240, 4
      %s242 = scalar_lea.vmem %s1, %s241
      %p243 = pneg %p89
      %p244 = pneg %p86
      %p245 = pneg %p110
      %p246 = pneg %p107
      %p247 = pneg %p131
      %p248 = pneg %p128
      %p249 = pneg %p159
      %p250 = pneg %p156
      %p251 = scmp.lt.s32.totalorder %s20, 1
      %s252 = scalar_select %p251, %s20, 1
      %p253 = scmp.lt.s32.totalorder %s21, 0
      %s254 = scalar_select %p253, %s21, 0
      %s255 = sadd.s32 %s254, %s252
      %s256 = scalar_lea.vmem %s4, %s255
      %s257 = sadd.s32 %s21, %s22
      %s258 = smul.u32 2, %s257
      %p259 = scmp.lt.s32.totalorder %s20, 1
      %s260 = scalar_select %p259, %s20, 1
      %p261 = scmp.lt.s32.totalorder %s258, 1
      %s262 = scalar_select %p261, %s258, 1
      %s263 = smul.addr %s260, 2
      %s264 = sadd.s32 %s262, %s263
      %s265 = smul.addr %s264, 4
      %s266 = scalar_lea.vmem %s0, %s265
      %s267 = sadd.s32 %s21, %s22
      %s268 = smul.u32 2, %s267
      %s269 = sadd.s32 %s21, %s22
      %s270 = smul.u32 2, %s269
      %p271 = scmp.lt.s32.totalorder %s20, 1
      %s272 = scalar_select %p271, %s20, 1
      %p273 = scmp.lt.s32.totalorder %s270, 1
      %s274 = scalar_select %p273, %s270, 1
      %s275 = smul.addr %s272, 2
      %s276 = sadd.s32 %s274, %s275
      %s277 = smul.addr %s276, 4
      %s278 = scalar_lea.vmem %s1, %s277
      %s279 = sadd.s32 %s21, %s22
      %s280 = smul.u32 2, %s279
      %p281 = scmp.lt.s32.totalorder %s20, 1
      %s282 = scalar_select %p281, %s20, 1
      %p283 = scmp.lt.s32.totalorder %s21, 0
      %s284 = scalar_select %p283, %s21, 0
      %s285 = sadd.s32 %s284, %s282
      %s286 = scalar_lea.vmem %s4, %s285
      %p288 = scmp.eq.s32.totalorder %s22, 0
      // Predicated region
      $region37: #{hybrid_geometric_uncertainty_loss.1} parent=35 // pred_check
        %p289 = pneg %p288
      $region38: #{hybrid_geometric_uncertainty_loss.1} parent=35 // pred_check_branch
        %291 = sbr.rel (%p289) target = $region40
      $region39: #{hybrid_geometric_uncertainty_loss.1} parent=35 // pred_region
        %vm292 = vcmask 0
        %293 = vst.msk [vmem:[#allocation2] sm:$0x1] %vm292, 0.0
        %294 = vst.msk [vmem:[#allocation3] sm:$0x1] %vm292, 0.0
        %vm295 = vcmask 7168
        %296 = vst.msk [vmem:[#allocation4] sm:$0xff] %vm295, 0.0
      $region40: #{hybrid_geometric_uncertainty_loss.1} parent=35 // pred_fallthru
        _
      %v297 = vld [vmem:[%s266] sm:$0x77]
      %v298 = vld [vmem:[%s278] sm:$0x77]
      %v299 = vld [vmem:[#allocation3] sm:$0x1]
      %v300 = vsub.f32 %v297, %v298
      %v301 = vand.u32 2147483647, %v300
      %v303 = vcombine.high %v301, %v301
      %vm305 = vcmask 1042432
      %v306 = vsel %vm305, %v301, 0.0
      %v307 = vsel %vm305, %v303, 0.0
      %v308 = vadd.f32 %v306, %v307
      %309 = vadd.xlane.f32.xlu0 %v308
      %v310 = vpop.xlane.xlu0 %309
      %v311 = vrot.slane %v310, 4
      %v312 = vadd.f32 %v310, %v311
      %v313 = vrot.slane %v312, 2
      %v314 = vadd.f32 %v312, %v313
      %v315 = vrot.slane %v314, 1
      %v316 = vadd.f32 %v314, %v315
      %s317 = vtos %v316
      %v318 = vstv %s317
      %v319 = vadd.f32 %v299, %v318
      %vm320 = vcmask 0
      %321 = vst.msk [vmem:[#allocation3] sm:$0x1] %vm320, %v319
      %v322 = vld [vmem:[%s2] sm:$0xf]
      %v323 = vld [vmem:[%s2 + $0x4] sm:$0xf]
      %v325 = vcombine.high %v297, %v297
      %v327 = vpack.c.bf16 %v297, %v297
      %v328 = vpack.c.bf16 %v325, %v325
      %v331 = vunpack.c.l.b16 %v322
      %v332 = vunpack.c.l.b16 %v323
      %v333 = vpack.c.b16 %v332, %v331
      %vm334 = vcmask 23552
      %v336 = vsel %vm334, %v333, 0
      %vm338 = vcmask 1040384
      %vm339 = vcmask 1041408
      %v340 = vsel %vm338, 4294967295, 65535
      %v341 = vsel %vm339, %v340, 0
      %v343 = vand.u32 %v327, %v341
      %v346 = vand.u32 %v328, %v341
      %348 = vmatprep.subr.bf16.mxu0 %v346
      %349 = vmatpush1.bf16.msra.mxu0 %v343
      %350 = vmatprep.subr.bf16.mxu0 0
      %351 = vmatpush1.bf16.msra.mxu0 0
      %352 = vmatprep.subr.bf16.mxu0 0
      %353 = vmatpush1.bf16.msra.mxu0 0
      %354 = vmatprep.subr.bf16.mxu0 0
      %355 = vmatpush1.bf16.msra.mxu0 0
      %356 = vmatprep.subr.bf16.mxu0 0
      %357 = vmatpush1.bf16.msra.mxu0 0
      %358 = vmatprep.subr.bf16.mxu0 0
      %359 = vmatpush1.bf16.msra.mxu0 0
      %360 = vmatprep.subr.bf16.mxu0 0
      %361 = vmatpush1.bf16.msra.mxu0 0
      %362 = vmatprep.subr.bf16.mxu0 0
      %363 = vmatpush1.bf16.msra.mxu0 0
      %364 = vmatprep.subr.bf16.mxu0 0
      %365 = vmatpush1.bf16.msra.mxu0 0
      %366 = vmatprep.subr.bf16.mxu0 0
      %367 = vmatpush1.bf16.msra.mxu0 0
      %368 = vmatprep.subr.bf16.mxu0 0
      %369 = vmatpush1.bf16.msra.mxu0 0
      %370 = vmatprep.subr.bf16.mxu0 0
      %371 = vmatpush1.bf16.msra.mxu0 0
      %372 = vmatprep.subr.bf16.mxu0 0
      %373 = vmatpush1.bf16.msra.mxu0 0
      %374 = vmatprep.subr.bf16.mxu0 0
      %375 = vmatpush1.bf16.msra.mxu0 0
      %376 = vmatprep.subr.bf16.mxu0 0
      %377 = vmatpush1.bf16.msra.mxu0 0
      %378 = vmatprep.subr.bf16.mxu0 0
      %379 = vmatpush1.bf16.msra.mxu0 0
      %380 = vmatprep.mubr.bf16.mxu0 0
      %381 = vmatmul.mubr.bf16.gmra.mrb[0].mxu0 %v336
      %v382 = vpop.f32.mrb[0].mxu0
      %v383 = vadd.f32 0.0, %v382
      %v384 = vpop.f32.mrb[0].mxu0
      %v385 = vadd.f32 0.0, %v384
      %v386 = vpop.f32.mrb[0].mxu0
      %v387 = vadd.f32 0.0, %v386
      %v388 = vpop.f32.mrb[0].mxu0
      %v389 = vadd.f32 0.0, %v388
      %390 = vdwg.mxu0
      %v392 = vcombine.high %v298, %v298
      %v394 = vpack.c.bf16 %v298, %v298
      %v395 = vpack.c.bf16 %v392, %v392
      %v397 = vand.u32 %v394, %v341
      %v400 = vand.u32 %v395, %v341
      %402 = vmatprep.subr.bf16.mxu0 %v400
      %403 = vmatpush1.bf16.msra.mxu0 %v397
      %404 = vmatprep.subr.bf16.mxu0 0
      %405 = vmatpush1.bf16.msra.mxu0 0
      %406 = vmatprep.subr.bf16.mxu0 0
      %407 = vmatpush1.bf16.msra.mxu0 0
      %408 = vmatprep.subr.bf16.mxu0 0
      %409 = vmatpush1.bf16.msra.mxu0 0
      %410 = vmatprep.subr.bf16.mxu0 0
      %411 = vmatpush1.bf16.msra.mxu0 0
      %412 = vmatprep.subr.bf16.mxu0 0
      %413 = vmatpush1.bf16.msra.mxu0 0
      %414 = vmatprep.subr.bf16.mxu0 0
      %415 = vmatpush1.bf16.msra.mxu0 0
      %416 = vmatprep.subr.bf16.mxu0 0
      %417 = vmatpush1.bf16.msra.mxu0 0
      %418 = vmatprep.subr.bf16.mxu0 0
      %419 = vmatpush1.bf16.msra.mxu0 0
      %420 = vmatprep.subr.bf16.mxu0 0
      %421 = vmatpush1.bf16.msra.mxu0 0
      %422 = vmatprep.subr.bf16.mxu0 0
      %423 = vmatpush1.bf16.msra.mxu0 0
      %424 = vmatprep.subr.bf16.mxu0 0
      %425 = vmatpush1.bf16.msra.mxu0 0
      %426 = vmatprep.subr.bf16.mxu0 0
      %427 = vmatpush1.bf16.msra.mxu0 0
      %428 = vmatprep.subr.bf16.mxu0 0
      %429 = vmatpush1.bf16.msra.mxu0 0
      %430 = vmatprep.subr.bf16.mxu0 0
      %431 = vmatpush1.bf16.msra.mxu0 0
      %432 = vmatprep.subr.bf16.mxu0 0
      %433 = vmatpush1.bf16.msra.mxu0 0
      %434 = vmatprep.mubr.bf16.mxu0 0
      %435 = vmatmul.mubr.bf16.gmra.mrb[0].mxu0 %v336
      %v436 = vpop.f32.mrb[0].mxu0
      %v437 = vadd.f32 0.0, %v436
      %v438 = vpop.f32.mrb[0].mxu0
      %v439 = vadd.f32 0.0, %v438
      %v440 = vpop.f32.mrb[0].mxu0
      %v441 = vadd.f32 0.0, %v440
      %v442 = vpop.f32.mrb[0].mxu0
      %v443 = vadd.f32 0.0, %v442
      %444 = vdwg.mxu0
      %v445 = vmax.f32 %v383, 0.0
      %v446 = vmax.f32 %v385, 0.0
      %v447 = vmax.f32 %v437, 0.0
      %v448 = vmax.f32 %v439, 0.0
      %v449 = vsub.f32 %v445, %v447
      %v450 = vsub.f32 %v446, %v448
      %v451 = vand.u32 2147483647, %v449
      %v452 = vand.u32 2147483647, %v450
      %v453 = vld [vmem:[#allocation2] sm:$0x1]
      %v454 = vadd.f32 %v451, %v452
      %455 = vadd.xlane.f32.xlu0 %v454
      %v456 = vpop.xlane.xlu0 %455
      %v457 = vrot.slane %v456, 4
      %v458 = vadd.f32 %v456, %v457
      %v459 = vrot.slane %v458, 2
      %v460 = vadd.f32 %v458, %v459
      %v461 = vrot.slane %v460, 1
      %v462 = vadd.f32 %v460, %v461
      %s463 = vtos %v462
      %v464 = vstv %s463
      %v465 = vadd.f32 %v453, %v464
      %466 = vst.msk [vmem:[#allocation2] sm:$0x1] %vm320, %v465
      %v467 = vmul.f32 %v387, %v387
      %v468 = vmul.f32 %v389, %v389
      %v469 = vrot.slane %v467, 4
      %v470 = vadd.f32 %v467, %v469
      %v471 = vrot.slane %v470, 2
      %v472 = vadd.f32 %v470, %v471
      %v473 = vrot.slane %v472, 1
      %v474 = vadd.f32 %v472, %v473
      %v475 = vrot.slane %v468, 4
      %v476 = vadd.f32 %v468, %v475
      %v477 = vrot.slane %v476, 2
      %v478 = vadd.f32 %v476, %v477
      %v479 = vrot.slane %v478, 1
      %v480 = vadd.f32 %v478, %v479
      %v481 = vadd.f32 %v474, 1e-10
      %v482 = vadd.f32 %v480, 1e-10
      %v483 = vrsqrt.pop %v481
      %v484 = vrsqrt.pop %v482
      %v485 = vmul.f32 %v387, %v483
      %v486 = vmul.f32 %v389, %v484
      %v487 = vmul.f32 %v441, %v441
      %v488 = vmul.f32 %v443, %v443
      %v489 = vrot.slane %v487, 4
      %v490 = vadd.f32 %v487, %v489
      %v491 = vrot.slane %v490, 2
      %v492 = vadd.f32 %v490, %v491
      %v493 = vrot.slane %v492, 1
      %v494 = vadd.f32 %v492, %v493
      %v495 = vrot.slane %v488, 4
      %v496 = vadd.f32 %v488, %v495
      %v497 = vrot.slane %v496, 2
      %v498 = vadd.f32 %v496, %v497
      %v499 = vrot.slane %v498, 1
      %v500 = vadd.f32 %v498, %v499
      %v501 = vadd.f32 %v494, 1e-10
      %v502 = vadd.f32 %v500, 1e-10
      %v503 = vrsqrt.pop %v501
      %v504 = vrsqrt.pop %v502
      %v505 = vmul.f32 %v441, %v503
      %v506 = vmul.f32 %v443, %v504
      %v507 = vld [vmem:[#allocation4] sm:$0xff]
      %v508 = vsub.f32 %v485, %v505
      %v509 = vsub.f32 %v486, %v506
      %v510 = vmul.f32 %v508, %v508
      %v511 = vmul.f32 %v509, %v509
      %v512 = vadd.f32 %v510, %v511
      %513 = vadd.xlane.f32.xlu0 %v512
      %v514 = vpop.xlane.xlu0 %513
      %v515 = vadd.f32 %v507, %v514
      %vm516 = vcmask 7168
      %517 = vst.msk [vmem:[#allocation4] sm:$0xff] %vm516, %v515
      // Predicated region
      $region41: #{hybrid_geometric_uncertainty_loss.1} parent=35 // pred_check
        %p518 = pneg %p288
      $region42: #{hybrid_geometric_uncertainty_loss.1} parent=35 // pred_check_branch
        %520 = sbr.rel (%p518) target = $region44
      $region43: #{hybrid_geometric_uncertainty_loss.1} parent=35 // pred_region
        %v521 = vld [vmem:[#allocation4] sm:$0xff]
        %v522 = vld [vmem:[%s3] sm:$0xff]
        %v523 = vmul.f32 %v521, %v522
        %v524 = vsel %vm516, %v523, 0.0
        %525 = vadd.xlane.f32.xlu0 %v524
        %v526 = vpop.xlane.xlu0 %525
        %v527 = vrot.slane %v526, 4
        %v528 = vadd.f32 %v526, %v527
        %v529 = vrot.slane %v528, 2
        %v530 = vadd.f32 %v528, %v529
        %v531 = vrot.slane %v530, 1
        %v532 = vadd.f32 %v530, %v531
        %s533 = vtos %v532
        %v534 = vlaneseq
        %v535 = vand.u32 %v534, 127
        %vm536 = vcmp.eq.s32.totalorder %v535, 0
        %v537 = vld [vmem:[#allocation2] sm:$0x1]
        %vm538 = vcmp.eq.s32.totalorder %v535, 1
        %v539 = vld [vmem:[#allocation3] sm:$0x1]
        %vm540 = vcmp.eq.s32.totalorder %v535, 2
        %v541 = vstv %s533
        %v542 = vsel %vm540, %v541, 0.0
        %544 = vset.pattern.permute.xlu0 0
        %545 = vperm.xlu0 %544, %v539
        %v546 = vpop.permute.xlu0 %545
        %v548 = vlaneseq
        %v549 = vshrl.u32 %v548, 7
        %v550 = vsub.s32 0, %v549
        %v551 = vrot.slane %v546, %v550
        %v552 = vsel %vm538, %v551, %v542
        %554 = vset.pattern.permute.xlu0 0
        %555 = vperm.xlu0 %554, %v537
        %v556 = vpop.permute.xlu0 %555
        %v558 = vlaneseq
        %v559 = vshrl.u32 %v558, 7
        %v560 = vsub.s32 0, %v559
        %v561 = vrot.slane %v556, %v560
        %v562 = vsel %vm536, %v561, %v552
        %563 = vst [vmem:[%s286] sm:$0x1] %v562
      $region44: #{hybrid_geometric_uncertainty_loss.1} parent=35 // pred_fallthru
        _
      %p564 = scmp.lt.s32.totalorder %s20, 1
      %s565 = scalar_select %p564, %s20, 1
      %p566 = scmp.lt.s32.totalorder %s21, 0
      %s567 = scalar_select %p566, %s21, 0
      %s568 = sadd.s32 %s567, %s565
      %s569 = scalar_lea.vmem %s4, %s568
      // Predicated region
      $region45: #{hybrid_geometric_uncertainty_loss.1} parent=35 // pred_check
        %p570 = pneg %p156
      $region46: #{hybrid_geometric_uncertainty_loss.1} parent=35 // pred_check_branch
        %572 = sbr.rel (%p570) target = $region48
      $region47: #{hybrid_geometric_uncertainty_loss.1} parent=35 // pred_region
        _
      $region48: #{hybrid_geometric_uncertainty_loss.1} parent=35 // pred_fallthru
        _
    $region36: #{hybrid_geometric_uncertainty_loss.1} parent=5 // pred_fallthru
      _
    %p573 = scmp.le.s32.totalorder 2, %s10
    // Predicated region
    $region49: #{hybrid_geometric_uncertainty_loss.1} parent=5 // pred_check
      %p574 = pneg %p573
    $region50: #{hybrid_geometric_uncertainty_loss.1} parent=5 // pred_check_branch
      %576 = sbr.rel (%p574) target = $region52
    $region51: #{hybrid_geometric_uncertainty_loss.1} parent=5 // pred_region
      %s577 = ssub.s32 %s10, 2
      // Predicated region
      $region53: #{hybrid_geometric_uncertainty_loss.1} parent=51 // pred_check
        %p578 = pneg %p162
      $region54: #{hybrid_geometric_uncertainty_loss.1} parent=51 // pred_check_branch
        %580 = sbr.rel (%p578) target = $region56
      $region55: #{hybrid_geometric_uncertainty_loss.1} parent=51 // pred_region
        %p581 = scmp.lt.s32.totalorder %s23, 1
        %s582 = scalar_select %p581, %s23, 1
        %p583 = scmp.lt.s32.totalorder %s24, 0
        %s584 = scalar_select %p583, %s24, 0
        %s585 = sadd.s32 %s584, %s582
        %s586 = scalar_lea.vmem %s4, %s585
      $region56: #{hybrid_geometric_uncertainty_loss.1} parent=51 // pred_fallthru
        _
    $region52: #{hybrid_geometric_uncertainty_loss.1} parent=5 // pred_fallthru
      _
  $region6: #{hybrid_geometric_uncertainty_loss.1} parent=0 // loop_footer
    %s14 = sadd.s32 1, %s10
  $region7: #{hybrid_geometric_uncertainty_loss.1} parent=0 // loop_footer_branch
    %9 = sbr.rel target = $region3
  $region8: #{hybrid_geometric_uncertainty_loss.1} parent=0 // loop_exit
    _

</llo_original>
